<compile_context>
chip_gen: v7x
topology: tpu7x:2x2x1
jax: 0.10.0
libtpu: 0.0.40
codegen_flags: <defaults>
</compile_context>

<pallas_src>
import math

import jax
import jax.numpy as jnp
from jax.experimental import pallas as pl
from jax.experimental.pallas import tpu as pltpu


def _round_up(n, m):
    return ((n + m - 1) // m) * m


def actor_mlp_kernel(x_ref, w1_ref, b1_ref, w2_ref, b2_ref, w3_ref, b3_ref, o_ref):
    """Fused 3-layer MLP: tanh(relu(relu(x@W1+b1)@W2+b2)@W3+b3).

    x / weights arrive as bf16; all dots accumulate in f32 on the MXU; the
    elementwise epilogue (bias / ReLU / tanh) runs in f32 on the VPU/EUP and
    the result is stored as bf16 (lane-dense, unmasked vst).
    """
    h1 = jnp.dot(x_ref[...], w1_ref[...], preferred_element_type=jnp.float32) + b1_ref[...]
    h1 = jnp.maximum(h1, 0.0)                                       # ReLU (VPU)
    h2 = jnp.dot(h1.astype(jnp.bfloat16), w2_ref[...],
                 preferred_element_type=jnp.float32) + b2_ref[...]
    h2 = jnp.maximum(h2, 0.0)                                       # ReLU (VPU)
    y = jnp.dot(h2.astype(jnp.bfloat16), w3_ref[...],
                preferred_element_type=jnp.float32) + b3_ref[...]
    o_ref[...] = jnp.tanh(y).astype(o_ref.dtype)                    # Tanh (EUP)


def actor_forward(x, params, *, tb_max=2048):
    """Run the fused Actor MLP as a single Pallas kernel.

    x: (B, state_dim) float32
    params: dict with w1 (S,H1), b1 (1,H1), w2 (H1,H2), b2 (1,H2),
            w3 (H2,A), b3 (1,A)   (all float32)
    returns: (B, A) float32 in [-1, 1]

    tb_max: max batch-tile size.  2048 is safe for every generation's default
            scoped VMEM; v6e/v7x can use 4096.
    """
    B, S = x.shape
    H1 = params["w1"].shape[1]
    H2 = params["w2"].shape[1]
    A = params["w3"].shape[1]

    # --- Weight prep (all in XLA, outside the kernel) -----------------------
    # bf16 weights halve the dominant weight HBM traffic; biases stay f32.
    w1 = params["w1"].astype(jnp.bfloat16)
    w2 = params["w2"].astype(jnp.bfloat16)
    b1 = params["b1"]
    b2 = params["b2"]

    # Pad the last layer's output width to a lane-dense multiple of 128 so the
    # final matmul/store are unmasked.  Zero pads -> tanh(0)=0 in dead lanes.
    A_pad = max(128, _round_up(A, 128))
    w3 = jnp.pad(params["w3"], ((0, 0), (0, A_pad - A))).astype(jnp.bfloat16)
    b3 = jnp.pad(params["b3"], ((0, 0), (0, A_pad - A)))

    # --- Batch tiling --------------------------------------------------------
    # >=2 tiles (so v7x can use both TensorCores), tiles capped at tb_max,
    # rounded to full 8-row sublanes, padding waste bounded by the adaptive
    # tile size instead of always padding up to a tb_max multiple.
    n_tiles = max(2, pl.cdiv(B, tb_max))
    TB = _round_up(max(pl.cdiv(B, n_tiles), 8), 8)
    B_pad = n_tiles * TB

    x_pad = jnp.pad(x, ((0, B_pad - B), (0, 0))) if B_pad != B else x
    x_pad = x_pad.astype(jnp.bfloat16)   # cast once in XLA, not per-tile in-kernel

    grid = (n_tiles,)

    # Weights / biases: constant index_map -> fetched once, VMEM-resident.
    const2d = lambda i: (0, 0)
    in_specs = [
        pl.BlockSpec((TB, S), lambda i: (i, 0)),      # x tile per grid step
        pl.BlockSpec((S, H1), const2d),               # w1
        pl.BlockSpec((1, H1), const2d),               # b1
        pl.BlockSpec((H1, H2), const2d),              # w2
        pl.BlockSpec((1, H2), const2d),               # b2
        pl.BlockSpec((H2, A_pad), const2d),           # w3 (padded)
        pl.BlockSpec((1, A_pad), const2d),            # b3 (padded)
    ]
    out_specs = pl.BlockSpec((TB, A_pad), lambda i: (i, 0))

    flops = 2 * B_pad * (S * H1 + H1 * H2 + H2 * A_pad)
    bytes_accessed = (
        x_pad.size * 2
        + w1.size * 2 + w2.size * 2 + w3.size * 2
        + b1.size * 4 + b2.size * 4 + b3.size * 4
        + B_pad * A_pad * 2
    )

    out = pl.pallas_call(
        actor_mlp_kernel,
        out_shape=jax.ShapeDtypeStruct((B_pad, A_pad), jnp.bfloat16),
        grid=grid,
        in_specs=in_specs,
        out_specs=out_specs,
        compiler_params=pltpu.CompilerParams(
            dimension_semantics=("parallel",),
        ),
        cost_estimate=pl.CostEstimate(
            flops=flops,
            transcendentals=B_pad * A_pad,
            bytes_accessed=bytes_accessed,
        ),
    )(x_pad, w1, b1, w2, b2, w3, b3)

    # Strip the batch / lane padding and return f32 (both free in XLA).
    return out[:B, :A].astype(jnp.float32)


def init_actor_params(key, state_dim, action_dim, hidden_dims=(256, 256)):
    """Deterministic init mirroring nn.Linear's default U(-1/sqrt(fan_in), ...)."""
    dims = [state_dim, hidden_dims[0], hidden_dims[1], action_dim]
    params = {}
    for i in range(3):
        key, kw, kb = jax.random.split(key, 3)
        fan_in, fan_out = dims[i], dims[i + 1]
        bound = 1.0 / math.sqrt(fan_in)
        params[f"w{i+1}"] = jax.random.uniform(
            kw, (fan_in, fan_out), jnp.float32, minval=-bound, maxval=bound)
        params[f"b{i+1}"] = jax.random.uniform(
            kb, (1, fan_out), jnp.float32, minval=-bound, maxval=bound)
    return params


def actor_forward_ref_f32(x, params):
    """Pure-JAX f32 reference (matches the PyTorch module exactly)."""
    h = jnp.maximum(x @ params["w1"] + params["b1"], 0.0)
    h = jnp.maximum(h @ params["w2"] + params["b2"], 0.0)
    return jnp.tanh(h @ params["w3"] + params["b3"])


def actor_forward_ref_bf16(x, params):
    """Pure-JAX reference mirroring the kernel's bf16-in / f32-acc / bf16-out recipe."""
    w1 = params["w1"].astype(jnp.bfloat16)
    w2 = params["w2"].astype(jnp.bfloat16)
    w3 = params["w3"].astype(jnp.bfloat16)
    h = jnp.dot(x.astype(jnp.bfloat16), w1,
                preferred_element_type=jnp.float32) + params["b1"]
    h = jnp.maximum(h, 0.0)
    h = jnp.dot(h.astype(jnp.bfloat16), w2,
                preferred_element_type=jnp.float32) + params["b2"]
    h = jnp.maximum(h, 0.0)
    y = jnp.dot(h.astype(jnp.bfloat16), w3,
                preferred_element_type=jnp.float32) + params["b3"]
    # Kernel stores the tanh result as bf16; mirror that quantization here.
    return jnp.tanh(y).astype(jnp.bfloat16).astype(jnp.float32)


if __name__ == "__main__":
    key = jax.random.PRNGKey(0)

    # Small shapes consistent with the module's forward:
    batch, state_dim, action_dim = 2, 16, 4
    hidden_dims = (256, 256)

    kparam, kx = jax.random.split(key)
    params = init_actor_params(kparam, state_dim, action_dim, hidden_dims)
    x = jax.random.normal(kx, (batch, state_dim), jnp.float32)

    out = actor_forward(x, params)
    out = jax.block_until_ready(out)
    assert out.shape == (batch, action_dim)

    # Check against a reference using the identical bf16/f32/bf16 recipe.
    ref_bf16 = actor_forward_ref_bf16(x, params)
    assert jnp.allclose(out, ref_bf16, atol=1e-2, rtol=1e-2), \
        "mismatch vs bf16-recipe JAX reference"

    # Looser check against the exact f32 PyTorch-equivalent math.
    ref_f32 = actor_forward_ref_f32(x, params)
    assert jnp.allclose(out, ref_f32, atol=3e-2, rtol=3e-2), \
        "mismatch vs f32 JAX reference"

    print("KERNEL_OK")
</pallas_src>

<mosaic_0001>
module attributes {stable_mosaic.version = 11 : i64} {
  func.func @actor_mlp_kernel(%arg0: i32, %arg1: memref<8x16xbf16, #tpu.memory_space<vmem>>, %arg2: memref<16x256xbf16, #tpu.memory_space<vmem>>, %arg3: memref<1x256xf32, #tpu.memory_space<vmem>>, %arg4: memref<256x256xbf16, #tpu.memory_space<vmem>>, %arg5: memref<1x256xf32, #tpu.memory_space<vmem>>, %arg6: memref<256x128xbf16, #tpu.memory_space<vmem>>, %arg7: memref<1x128xf32, #tpu.memory_space<vmem>>, %arg8: memref<8x128xbf16, #tpu.memory_space<vmem>>) attributes {dimension_semantics = [#tpu.dimension_semantics<parallel>], iteration_bounds = array<i64: 2>, scalar_prefetch = 0 : i64, scratch_operands = 0 : i64, tpu.core_type = #tpu.core_type<tc>, window_params = [{transform_indices = @transform_0, window_bounds = array<i64: 8, 16>}, {pipeline_mode = #tpu.pipeline_mode<synchronous>, transform_indices = @transform_1, window_bounds = array<i64: 16, 256>}, {pipeline_mode = #tpu.pipeline_mode<synchronous>, transform_indices = @transform_2, window_bounds = array<i64: 1, 256>}, {pipeline_mode = #tpu.pipeline_mode<synchronous>, transform_indices = @transform_3, window_bounds = array<i64: 256, 256>}, {pipeline_mode = #tpu.pipeline_mode<synchronous>, transform_indices = @transform_4, window_bounds = array<i64: 1, 256>}, {pipeline_mode = #tpu.pipeline_mode<synchronous>, transform_indices = @transform_5, window_bounds = array<i64: 256, 128>}, {pipeline_mode = #tpu.pipeline_mode<synchronous>, transform_indices = @transform_6, window_bounds = array<i64: 1, 128>}, {transform_indices = @transform_7, window_bounds = array<i64: 8, 128>}]} {
    %c0 = arith.constant 0 : index
    %c0_0 = arith.constant 0 : index
    %0 = vector.load %arg1[%c0, %c0_0] : memref<8x16xbf16, #tpu.memory_space<vmem>>, vector<8x16xbf16>
    %c0_1 = arith.constant 0 : index
    %c0_2 = arith.constant 0 : index
    %1 = vector.load %arg2[%c0_1, %c0_2] : memref<16x256xbf16, #tpu.memory_space<vmem>>, vector<16x256xbf16>
    %cst = arith.constant dense<0.000000e+00> : vector<8x256xf32>
    %2 = tpu.matmul %0, %1, %cst {dimension_numbers = #tpu.dot_dimension_numbers<[1], [0], [0], [1], [0, 0, 1, 1], [], []>} : vector<8x16xbf16>, vector<16x256xbf16>, vector<8x256xf32> -> vector<8x256xf32>
    %c0_3 = arith.constant 0 : index
    %c0_4 = arith.constant 0 : index
    %3 = vector.load %arg3[%c0_3, %c0_4] : memref<1x256xf32, #tpu.memory_space<vmem>>, vector<1x256xf32>
    %4 = vector.broadcast %3 : vector<1x256xf32> to vector<8x256xf32>
    %5 = arith.addf %2, %4 : vector<8x256xf32>
    %cst_5 = arith.constant 0.000000e+00 : f32
    %6 = vector.broadcast %cst_5 : f32 to vector<8x256xf32>
    %7 = arith.maximumf %5, %6 : vector<8x256xf32>
    %8 = arith.truncf %7 : vector<8x256xf32> to vector<8x256xbf16>
    %c0_6 = arith.constant 0 : index
    %c0_7 = arith.constant 0 : index
    %9 = vector.load %arg4[%c0_6, %c0_7] : memref<256x256xbf16, #tpu.memory_space<vmem>>, vector<256x256xbf16>
    %cst_8 = arith.constant dense<0.000000e+00> : vector<8x256xf32>
    %10 = tpu.matmul %8, %9, %cst_8 {dimension_numbers = #tpu.dot_dimension_numbers<[1], [0], [0], [1], [0, 0, 1, 1], [], []>} : vector<8x256xbf16>, vector<256x256xbf16>, vector<8x256xf32> -> vector<8x256xf32>
    %c0_9 = arith.constant 0 : index
    %c0_10 = arith.constant 0 : index
    %11 = vector.load %arg5[%c0_9, %c0_10] : memref<1x256xf32, #tpu.memory_space<vmem>>, vector<1x256xf32>
    %12 = vector.broadcast %11 : vector<1x256xf32> to vector<8x256xf32>
    %13 = arith.addf %10, %12 : vector<8x256xf32>
    %cst_11 = arith.constant 0.000000e+00 : f32
    %14 = vector.broadcast %cst_11 : f32 to vector<8x256xf32>
    %15 = arith.maximumf %13, %14 : vector<8x256xf32>
    %16 = arith.truncf %15 : vector<8x256xf32> to vector<8x256xbf16>
    %c0_12 = arith.constant 0 : index
    %c0_13 = arith.constant 0 : index
    %17 = vector.load %arg6[%c0_12, %c0_13] : memref<256x128xbf16, #tpu.memory_space<vmem>>, vector<256x128xbf16>
    %cst_14 = arith.constant dense<0.000000e+00> : vector<8x128xf32>
    %18 = tpu.matmul %16, %17, %cst_14 {dimension_numbers = #tpu.dot_dimension_numbers<[1], [0], [0], [1], [0, 0, 1, 1], [], []>} : vector<8x256xbf16>, vector<256x128xbf16>, vector<8x128xf32> -> vector<8x128xf32>
    %c0_15 = arith.constant 0 : index
    %c0_16 = arith.constant 0 : index
    %19 = vector.load %arg7[%c0_15, %c0_16] : memref<1x128xf32, #tpu.memory_space<vmem>>, vector<1x128xf32>
    %20 = vector.broadcast %19 : vector<1x128xf32> to vector<8x128xf32>
    %21 = arith.addf %18, %20 : vector<8x128xf32>
    %22 = math.tanh %21 : vector<8x128xf32>
    %23 = arith.truncf %22 : vector<8x128xf32> to vector<8x128xbf16>
    %c0_17 = arith.constant 0 : index
    %c0_18 = arith.constant 0 : index
    %24 = vector.load %arg8[%c0_17, %c0_18] : memref<8x128xbf16, #tpu.memory_space<vmem>>, vector<8x128xbf16>
    tpu.vector_store %arg8[%c0_17, %c0_18], %23 {strides = array<i32>} : memref<8x128xbf16, #tpu.memory_space<vmem>>, vector<8x128xbf16>,
    return
  }
  func.func @transform_0(%arg0: i32) -> (i32, i32) {
    %c0_i32 = arith.constant 0 : i32
    %c0_i32_0 = arith.constant 0 : i32
    return %arg0, %c0_i32 : i32, i32
  }
  func.func @transform_1(%arg0: i32) -> (i32, i32) {
    %c0_i32 = arith.constant 0 : i32
    %c0_i32_0 = arith.constant 0 : i32
    %c0_i32_1 = arith.constant 0 : i32
    return %c0_i32, %c0_i32_0 : i32, i32
  }
  func.func @transform_2(%arg0: i32) -> (i32, i32) {
    %c0_i32 = arith.constant 0 : i32
    %c0_i32_0 = arith.constant 0 : i32
    %c0_i32_1 = arith.constant 0 : i32
    return %c0_i32, %c0_i32_0 : i32, i32
  }
  func.func @transform_3(%arg0: i32) -> (i32, i32) {
    %c0_i32 = arith.constant 0 : i32
    %c0_i32_0 = arith.constant 0 : i32
    %c0_i32_1 = arith.constant 0 : i32
    return %c0_i32, %c0_i32_0 : i32, i32
  }
  func.func @transform_4(%arg0: i32) -> (i32, i32) {
    %c0_i32 = arith.constant 0 : i32
    %c0_i32_0 = arith.constant 0 : i32
    %c0_i32_1 = arith.constant 0 : i32
    return %c0_i32, %c0_i32_0 : i32, i32
  }
  func.func @transform_5(%arg0: i32) -> (i32, i32) {
    %c0_i32 = arith.constant 0 : i32
    %c0_i32_0 = arith.constant 0 : i32
    %c0_i32_1 = arith.constant 0 : i32
    return %c0_i32, %c0_i32_0 : i32, i32
  }
  func.func @transform_6(%arg0: i32) -> (i32, i32) {
    %c0_i32 = arith.constant 0 : i32
    %c0_i32_0 = arith.constant 0 : i32
    %c0_i32_1 = arith.constant 0 : i32
    return %c0_i32, %c0_i32_0 : i32, i32
  }
  func.func @transform_7(%arg0: i32) -> (i32, i32) {
    %c0_i32 = arith.constant 0 : i32
    %c0_i32_0 = arith.constant 0 : i32
    return %arg0, %c0_i32 : i32, i32
  }
}

</mosaic_0001>

<llo_original>
// kernel: tpu_custom_call.1
$region0: #{tpu_custom_call.1}
  #allocation0 [shape = 'u32[]', space=smem, size = 0x4, offset = 0x4, fixed_abs, tag = 'smem constant byte address 0x4 - core index']
  #allocation1 [shape = 'u32[144,128]{1,0:T(1,128)}', space=vmem, size = 0x12000, scoped, tag = 'internal scratch']
  %s0 = inlined_call_operand.hbm [shape: bf16[16,16], index: 0, kind: input, shape index: {}]
  %s1 = inlined_call_operand.hbm [shape: bf16[16,256], index: 1, kind: input, shape index: {}]
  %s2 = inlined_call_operand.vmem [shape: f32[1,256], index: 2, kind: input, shape index: {}]
  %s3 = inlined_call_operand.hbm [shape: bf16[256,256], index: 3, kind: input, shape index: {}]
  %s4 = inlined_call_operand.vmem [shape: f32[1,256], index: 4, kind: input, shape index: {}]
  %s5 = inlined_call_operand.hbm [shape: bf16[256,128], index: 5, kind: input, shape index: {}]
  %s6 = inlined_call_operand.vmem [shape: f32[1,128], index: 6, kind: input, shape index: {}]
  %s7 = inlined_call_operand.hbm [shape: bf16[16,128], index: 7, kind: output, shape index: {}]
  %s8 = sld [smem:[#allocation0]]
  $region77: #{tpu_custom_call.1} parent=0
    _
  %s10 = ssub.s32 1, %s8
  %s11 = scalar_select 0, %s10, %s8
  $region1: #{tpu_custom_call.1} parent=0
    #allocation2 [shape = 'u8[4096]{0}', space=vmem, size = 0x1000, scoped, tag = 'input window, operand 0']
    #allocation3 [shape = 's32[2]{0}', space=sflag, size = 0x8, scoped, tag = 'scoped memory for tpu_custom_call.1']
    #allocation4 [shape = 's32[2]{0}', space=sflag, size = 0x8, scoped, tag = 'scoped memory for tpu_custom_call.1']
    #allocation5 [shape = 'u8[8192]{0}', space=vmem, size = 0x2000, scoped, tag = 'input window, operand 1, single buffered']
    #allocation6 [shape = 's32[1]{0}', space=sflag, size = 0x4, scoped, tag = 'scoped memory for tpu_custom_call.1']
    #allocation7 [shape = 'u8[131072]{0}', space=vmem, size = 0x20000, scoped, tag = 'input window, operand 3, single buffered']
    #allocation8 [shape = 'u8[65536]{0}', space=vmem, size = 0x10000, scoped, tag = 'input window, operand 5, single buffered']
    #allocation9 [shape = 's32[1]{0}', space=sflag, size = 0x4, scoped, tag = 'scoped memory for tpu_custom_call.1']
    #allocation10 [shape = 'u8[4096]{0}', space=vmem, size = 0x1000, scoped, tag = 'output window, operand 0']
    %12 = vsyncpa [#allocation3], 0
    %s13 = scalar_lea.sflag [#allocation3], 1
    %14 = vsyncpa %s13, 0
    %15 = vsyncpa [#allocation6], 0
    %16 = vsyncpa [#allocation9], 0
    %17 = vsyncpa [#allocation4], 0
    %s18 = scalar_lea.sflag [#allocation4], 1
    %19 = vsyncpa %s18, 0
    loop: start=0, step=1, limit=4
    $region2: #{tpu_custom_call.1} parent=1 // loop_pre_header
      _
    $region3: #{tpu_custom_call.1} parent=1 // loop_header
      %s21 = sphi 0, %s25
      %p22 = scmp.ge.s32.totalorder %s21, 4
      %s31 = sphi 0, %s33
      %s34 = sphi 0, %s31
      %s35 = sphi 0, %s34
      %s51 = sphi 0, %s35
      %s55 = sphi 0, %s55
      %s57 = sphi 0, %s55
      %s58 = sphi 0, %s57
      %s72 = sphi 0, %s58
      %s76 = sphi 0, %s76
      %s78 = sphi 0, %s76
      %s79 = sphi 0, %s78
      %s93 = sphi 0, %s79
      %s97 = sphi 0, %s97
      %s99 = sphi 0, %s97
      %s100 = sphi 0, %s99
      %s114 = sphi 0, %s100
      %s118 = sphi 0, %s118
      %s120 = sphi 0, %s118
      %s121 = sphi 0, %s120
      %s135 = sphi 0, %s121
      %s139 = sphi 0, %s139
      %s141 = sphi 0, %s139
      %s142 = sphi 0, %s141
      %s156 = sphi 0, %s142
      %s160 = sphi 0, %s160
      %s162 = sphi 0, %s160
      %s163 = sphi 0, %s162
      %s177 = sphi 0, %s163
      %s183 = sphi 0, %s185
      %s186 = sphi 0, %s183
      %s187 = sphi 0, %s186
      %s203 = sphi 0, %s187
    $region4: #{tpu_custom_call.1} parent=1 // loop_header_branch
      %24 = sbr.rel (%p22) target = $region8
    $region5: #{tpu_custom_call.1} parent=1 // loop_body
      %s26 = ssub.s32 %s21, 1
      %s27 = ssub.s32 %s21, 2
      %s28 = sadd.s32 %s21, 1
      %s29 = ssub.s32 %s21, %s28
      %p30 = scmp.eq.s32.totalorder %s29, 0
      %s32 = sadd.s32 %s31, 1
      %s33 = scalar_select %p30, %s31, %s32
      %p36 = pneg %p30
      %p37 = scmp.eq.s32.totalorder %s21, 1
      %p38 = por %p36, %p37
      %p39 = scmp.ne.s32.totalorder %s31, %s34
      %p40 = scmp.eq.s32.totalorder %s21, 0
      %p41 = por %p39, %p40
      %p42 = scmp.ne.s32.totalorder %s31, %s34
      %p43 = scmp.eq.s32.totalorder %s26, 1
      %p44 = por %p42, %p43
      %p45 = scmp.ne.s32.totalorder %s34, %s35
      %p46 = scmp.eq.s32.totalorder %s26, 0
      %p47 = por %p45, %p46
      %p48 = scmp.ne.s32.totalorder %s34, %s35
      %p49 = scmp.eq.s32.totalorder %s27, 1
      %p50 = por %p48, %p49
      %p52 = scmp.ne.s32.totalorder %s35, %s51
      %p53 = scmp.eq.s32.totalorder %s27, 0
      %p54 = por %p52, %p53
      %s56 = sadd.s32 %s55, 1
      %p59 = scmp.eq.s32.totalorder %s21, 1
      %p60 = scmp.ne.s32.totalorder %s55, %s57
      %p61 = scmp.eq.s32.totalorder %s21, 0
      %p62 = por %p60, %p61
      %p63 = scmp.ne.s32.totalorder %s55, %s57
      %p64 = scmp.eq.s32.totalorder %s26, 1
      %p65 = por %p63, %p64
      %p66 = scmp.ne.s32.totalorder %s57, %s58
      %p67 = scmp.eq.s32.totalorder %s26, 0
      %p68 = por %p66, %p67
      %p69 = scmp.ne.s32.totalorder %s57, %s58
      %p70 = scmp.eq.s32.totalorder %s27, 1
      %p71 = por %p69, %p70
      %p73 = scmp.ne.s32.totalorder %s58, %s72
      %p74 = scmp.eq.s32.totalorder %s27, 0
      %p75 = por %p73, %p74
      %s77 = sadd.s32 %s76, 1
      %p80 = scmp.eq.s32.totalorder %s21, 1
      %p81 = scmp.ne.s32.totalorder %s76, %s78
      %p82 = scmp.eq.s32.totalorder %s21, 0
      %p83 = por %p81, %p82
      %p84 = scmp.ne.s32.totalorder %s76, %s78
      %p85 = scmp.eq.s32.totalorder %s26, 1
      %p86 = por %p84, %p85
      %p87 = scmp.ne.s32.totalorder %s78, %s79
      %p88 = scmp.eq.s32.totalorder %s26, 0
      %p89 = por %p87, %p88
      %p90 = scmp.ne.s32.totalorder %s78, %s79
      %p91 = scmp.eq.s32.totalorder %s27, 1
      %p92 = por %p90, %p91
      %p94 = scmp.ne.s32.totalorder %s79, %s93
      %p95 = scmp.eq.s32.totalorder %s27, 0
      %p96 = por %p94, %p95
      %s98 = sadd.s32 %s97, 1
      %p101 = scmp.eq.s32.totalorder %s21, 1
      %p102 = scmp.ne.s32.totalorder %s97, %s99
      %p103 = scmp.eq.s32.totalorder %s21, 0
      %p104 = por %p102, %p103
      %p105 = scmp.ne.s32.totalorder %s97, %s99
      %p106 = scmp.eq.s32.totalorder %s26, 1
      %p107 = por %p105, %p106
      %p108 = scmp.ne.s32.totalorder %s99, %s100
      %p109 = scmp.eq.s32.totalorder %s26, 0
      %p110 = por %p108, %p109
      %p111 = scmp.ne.s32.totalorder %s99, %s100
      %p112 = scmp.eq.s32.totalorder %s27, 1
      %p113 = por %p111, %p112
      %p115 = scmp.ne.s32.totalorder %s100, %s114
      %p116 = scmp.eq.s32.totalorder %s27, 0
      %p117 = por %p115, %p116
      %s119 = sadd.s32 %s118, 1
      %p122 = scmp.eq.s32.totalorder %s21, 1
      %p123 = scmp.ne.s32.totalorder %s118, %s120
      %p124 = scmp.eq.s32.totalorder %s21, 0
      %p125 = por %p123, %p124
      %p126 = scmp.ne.s32.totalorder %s118, %s120
      %p127 = scmp.eq.s32.totalorder %s26, 1
      %p128 = por %p126, %p127
      %p129 = scmp.ne.s32.totalorder %s120, %s121
      %p130 = scmp.eq.s32.totalorder %s26, 0
      %p131 = por %p129, %p130
      %p132 = scmp.ne.s32.totalorder %s120, %s121
      %p133 = scmp.eq.s32.totalorder %s27, 1
      %p134 = por %p132, %p133
      %p136 = scmp.ne.s32.totalorder %s121, %s135
      %p137 = scmp.eq.s32.totalorder %s27, 0
      %p138 = por %p136, %p137
      %s140 = sadd.s32 %s139, 1
      %p143 = scmp.eq.s32.totalorder %s21, 1
      %p144 = scmp.ne.s32.totalorder %s139, %s141
      %p145 = scmp.eq.s32.totalorder %s21, 0
      %p146 = por %p144, %p145
      %p147 = scmp.ne.s32.totalorder %s139, %s141
      %p148 = scmp.eq.s32.totalorder %s26, 1
      %p149 = por %p147, %p148
      %p150 = scmp.ne.s32.totalorder %s141, %s142
      %p151 = scmp.eq.s32.totalorder %s26, 0
      %p152 = por %p150, %p151
      %p153 = scmp.ne.s32.totalorder %s141, %s142
      %p154 = scmp.eq.s32.totalorder %s27, 1
      %p155 = por %p153, %p154
      %p157 = scmp.ne.s32.totalorder %s142, %s156
      %p158 = scmp.eq.s32.totalorder %s27, 0
      %p159 = por %p157, %p158
      %s161 = sadd.s32 %s160, 1
      %p164 = scmp.eq.s32.totalorder %s21, 1
      %p165 = scmp.ne.s32.totalorder %s160, %s162
      %p166 = scmp.eq.s32.totalorder %s21, 0
      %p167 = por %p165, %p166
      %p168 = scmp.ne.s32.totalorder %s160, %s162
      %p169 = scmp.eq.s32.totalorder %s26, 1
      %p170 = por %p168, %p169
      %p171 = scmp.ne.s32.totalorder %s162, %s163
      %p172 = scmp.eq.s32.totalorder %s26, 0
      %p173 = por %p171, %p172
      %p174 = scmp.ne.s32.totalorder %s162, %s163
      %p175 = scmp.eq.s32.totalorder %s27, 1
      %p176 = por %p174, %p175
      %p178 = scmp.ne.s32.totalorder %s163, %s177
      %p179 = scmp.eq.s32.totalorder %s27, 0
      %p180 = por %p178, %p179
      %s181 = ssub.s32 %s21, %s28
      %p182 = scmp.eq.s32.totalorder %s181, 0
      %s184 = sadd.s32 %s183, 1
      %s185 = scalar_select %p182, %s183, %s184
      %p188 = pneg %p182
      %p189 = scmp.eq.s32.totalorder %s21, 1
      %p190 = por %p188, %p189
      %p191 = scmp.ne.s32.totalorder %s183, %s186
      %p192 = scmp.eq.s32.totalorder %s21, 0
      %p193 = por %p191, %p192
      %p194 = scmp.ne.s32.totalorder %s183, %s186
      %p195 = scmp.eq.s32.totalorder %s26, 1
      %p196 = por %p194, %p195
      %p197 = scmp.ne.s32.totalorder %s186, %s187
      %p198 = scmp.eq.s32.totalorder %s26, 0
      %p199 = por %p197, %p198
      %p200 = scmp.ne.s32.totalorder %s186, %s187
      %p201 = scmp.eq.s32.totalorder %s27, 1
      %p202 = por %p200, %p201
      %p204 = scmp.ne.s32.totalorder %s187, %s203
      %p205 = scmp.eq.s32.totalorder %s27, 0
      %p206 = por %p204, %p205
      %p207 = scmp.le.s32.totalorder 1, %s21
      %p208 = scmp.lt.s32.totalorder %s21, 3
      %p209 = pnand %p207, %p208
      %p210 = pneg %p209
      // Predicated region
      $region9: #{tpu_custom_call.1} parent=5 // pred_check
        _
      $region10: #{tpu_custom_call.1} parent=5 // pred_check_branch
        %212 = sbr.rel (%p209) target = $region12
      $region11: #{tpu_custom_call.1} parent=5 // pred_region
        %s213 = ssub.s32 %s21, 1
        // Predicated region
        $region13: #{tpu_custom_call.1} parent=11 // pred_check
          %p214 = pneg %p68
        $region14: #{tpu_custom_call.1} parent=11 // pred_check_branch
          %216 = sbr.rel (%p214) target = $region16
        $region15: #{tpu_custom_call.1} parent=11 // pred_region
          %s218 = ssub.s32 256, 256
          %219 = vsyncadd [#allocation6], %s218
          %s220 = sshll.u32 [#allocation5], 4
          %s221 = int_to_ptr.vmem [resolvable:$true] %s220
          %226 = dma.hbm_to_vmem [thread:$0]  %s1, 256, %s221, [#allocation6], 128, 128, 8
        $region16: #{tpu_custom_call.1} parent=11 // pred_fallthru
          _
        // Predicated region
        $region17: #{tpu_custom_call.1} parent=11 // pred_check
          %p227 = pneg %p89
        $region18: #{tpu_custom_call.1} parent=11 // pred_check_branch
          %229 = sbr.rel (%p227) target = $region20
        $region19: #{tpu_custom_call.1} parent=11 // pred_region
          _
        $region20: #{tpu_custom_call.1} parent=11 // pred_fallthru
          _
        // Predicated region
        $region21: #{tpu_custom_call.1} parent=11 // pred_check
          %p230 = pneg %p110
        $region22: #{tpu_custom_call.1} parent=11 // pred_check_branch
          %232 = sbr.rel (%p230) target = $region24
        $region23: #{tpu_custom_call.1} parent=11 // pred_region
          %s234 = ssub.s32 4096, 4096
          %235 = vsyncadd [#allocation6], %s234
          %s236 = sshll.u32 [#allocation7], 4
          %s237 = int_to_ptr.vmem [resolvable:$true] %s236
          %242 = dma.hbm_to_vmem [thread:$0]  %s3, 4096, %s237, [#allocation6], 128, 128, 8
        $region24: #{tpu_custom_call.1} parent=11 // pred_fallthru
          _
        // Predicated region
        $region25: #{tpu_custom_call.1} parent=11 // pred_check
          %p243 = pneg %p131
        $region26: #{tpu_custom_call.1} parent=11 // pred_check_branch
          %245 = sbr.rel (%p243) target = $region28
        $region27: #{tpu_custom_call.1} parent=11 // pred_region
          _
        $region28: #{tpu_custom_call.1} parent=11 // pred_fallthru
          _
        // Predicated region
        $region29: #{tpu_custom_call.1} parent=11 // pred_check
          %p246 = pneg %p152
        $region30: #{tpu_custom_call.1} parent=11 // pred_check_branch
          %248 = sbr.rel (%p246) target = $region32
        $region31: #{tpu_custom_call.1} parent=11 // pred_region
          %s250 = ssub.s32 2048, 2048
          %251 = vsyncadd [#allocation9], %s250
          %s252 = sshll.u32 [#allocation8], 4
          %s253 = int_to_ptr.vmem [resolvable:$true] %s252
          %258 = dma.hbm_to_vmem [thread:$0]  %s5, 2048, %s253, [#allocation9], 64, 64, 4
        $region32: #{tpu_custom_call.1} parent=11 // pred_fallthru
          _
        // Predicated region
        $region33: #{tpu_custom_call.1} parent=11 // pred_check
          %p259 = pneg %p173
        $region34: #{tpu_custom_call.1} parent=11 // pred_check_branch
          %261 = sbr.rel (%p259) target = $region36
        $region35: #{tpu_custom_call.1} parent=11 // pred_region
          _
        $region36: #{tpu_custom_call.1} parent=11 // pred_fallthru
          _
      $region12: #{tpu_custom_call.1} parent=5 // pred_fallthru
        _
      %p262 = scmp.lt.s32.totalorder %s21, 2
      // Predicated region
      $region37: #{tpu_custom_call.1} parent=5 // pred_check
        %p263 = pneg %p262
      $region38: #{tpu_custom_call.1} parent=5 // pred_check_branch
        %265 = sbr.rel (%p263) target = $region40
      $region39: #{tpu_custom_call.1} parent=5 // pred_region
        // Predicated region
        $region41: #{tpu_custom_call.1} parent=39 // pred_check
          %p266 = pneg %p41
        $region42: #{tpu_custom_call.1} parent=39 // pred_check_branch
          %268 = sbr.rel (%p266) target = $region44
        $region43: #{tpu_custom_call.1} parent=39 // pred_region
          %s269 = sand.u32 %s31, 1
          %s270 = scalar_lea.sflag [#allocation3], %s269
          %s271 = sand.u32 %s31, 1
          %s272 = smul.addr %s271, 4
          %s273 = scalar_lea.vmem [#allocation2], %s272
          %s275 = ssub.s32 64, 64
          %276 = vsyncadd %s270, %s275
          %s277 = smul.addr %s21, 64
          %s278 = scalar_lea.hbm %s0, %s277
          %s280 = sshll.u32 %s273, 4
          %s281 = int_to_ptr.vmem [resolvable:$true] %s280
          %283 = dma.hbm_to_vmem [thread:$0]  %s278, 64, %s281, %s270
        $region44: #{tpu_custom_call.1} parent=39 // pred_fallthru
          _
      $region40: #{tpu_custom_call.1} parent=5 // pred_fallthru
        _
      %p284 = scmp.le.s32.totalorder 1, %s21
      %p285 = scmp.lt.s32.totalorder %s21, 3
      %p286 = pnand %p284, %p285
      %p287 = pneg %p286
      // Predicated region
      $region45: #{tpu_custom_call.1} parent=5 // pred_check
        _
      $region46: #{tpu_custom_call.1} parent=5 // pred_check_branch
        %289 = sbr.rel (%p286) target = $region48
      $region47: #{tpu_custom_call.1} parent=5 // pred_region
        %s290 = ssub.s32 %s21, 1
        %s291 = sand.u32 %s34, 1
        %s292 = scalar_lea.sflag [#allocation3], %s291
        %s293 = sand.u32 %s34, 1
        %s294 = smul.addr %s293, 4
        %s295 = scalar_lea.vmem [#allocation2], %s294
        // Predicated region
        $region49: #{tpu_custom_call.1} parent=47 // pred_check
          %p296 = pneg %p47
        $region50: #{tpu_custom_call.1} parent=47 // pred_check_branch
          %298 = sbr.rel (%p296) target = $region52
        $region51: #{tpu_custom_call.1} parent=47 // pred_region
          %299 = dma.done %s292, 64
        $region52: #{tpu_custom_call.1} parent=47 // pred_fallthru
          _
        // Predicated region
        $region53: #{tpu_custom_call.1} parent=47 // pred_check
          %p300 = pneg %p68
        $region54: #{tpu_custom_call.1} parent=47 // pred_check_branch
          %302 = sbr.rel (%p300) target = $region56
        $region55: #{tpu_custom_call.1} parent=47 // pred_region
          %303 = dma.done [#allocation6], 256
        $region56: #{tpu_custom_call.1} parent=47 // pred_fallthru
          _
        // Predicated region
        $region57: #{tpu_custom_call.1} parent=47 // pred_check
          %p304 = pneg %p110
        $region58: #{tpu_custom_call.1} parent=47 // pred_check_branch
          %306 = sbr.rel (%p304) target = $region60
        $region59: #{tpu_custom_call.1} parent=47 // pred_region
          %307 = dma.done [#allocation6], 4096
        $region60: #{tpu_custom_call.1} parent=47 // pred_fallthru
          _
        // Predicated region
        $region61: #{tpu_custom_call.1} parent=47 // pred_check
          %p308 = pneg %p152
        $region62: #{tpu_custom_call.1} parent=47 // pred_check_branch
          %310 = sbr.rel (%p308) target = $region64
        $region63: #{tpu_custom_call.1} parent=47 // pred_region
          %311 = dma.done [#allocation9], 2048
        $region64: #{tpu_custom_call.1} parent=47 // pred_fallthru
          _
        %s312 = sand.u32 %s34, 1
        %s313 = scalar_lea.sflag [#allocation3], %s312
        %s314 = sand.u32 %s34, 1
        %s315 = smul.addr %s314, 4
        %s316 = scalar_lea.vmem [#allocation2], %s315
        %p317 = pneg %p47
        %p318 = pneg %p44
        %p319 = pneg %p68
        %p320 = pneg %p65
        %p321 = pneg %p89
        %p322 = pneg %p86
        %p323 = pneg %p110
        %p324 = pneg %p107
        %p325 = pneg %p131
        %p326 = pneg %p128
        %p327 = pneg %p152
        %p328 = pneg %p149
        %p329 = pneg %p173
        %p330 = pneg %p170
        %p331 = pneg %p199
        %p332 = pneg %p196
        %s333 = sand.u32 %s186, 1
        %s334 = scalar_lea.sflag [#allocation4], %s333
        %s335 = sand.u32 %s186, 1
        %s336 = smul.addr %s335, 4
        %s337 = scalar_lea.vmem [#allocation10], %s336
        %v339 = vld [vmem:[%s295] sm:$0xf]
        %v340 = vld [vmem:[#allocation5] sm:$0xff]
        %v341 = vld [vmem:[#allocation5 + $0x8] sm:$0xff]
        %v342 = vld [vmem:[%s2] sm:$0x3]
        %v344 = vlaneseq
        %v345 = vshrl.u32 %v344, 7
        %v346 = vsub.s32 0, %v345
        %v347 = vrot.slane %v342, %v346
        %v348 = vlaneseq
        %v349 = vshrl.u32 %v348, 7
        %v350 = vsub.s32 1, %v349
        %v351 = vrot.slane %v342, %v350
        %v356 = vunpack.c.l.b16 %v340
        %v357 = vunpack.c.h.b16 %v340
        %v358 = vunpack.c.l.b16 %v341
        %v359 = vunpack.c.h.b16 %v341
        %v360 = vpack.c.b16 %v358, %v356
        %v361 = vpack.c.b16 %v359, %v357
        %vm364 = vcmask 130048
        %v366 = vsel %vm364, %v339, 0
        %368 = vmatprep.subr.bf16.mxu0 %v361
        %369 = vmatpush1.bf16.msra.mxu0 %v360
        %370 = vmatprep.subr.bf16.mxu0 0
        %371 = vmatpush1.bf16.msra.mxu0 0
        %372 = vmatprep.subr.bf16.mxu0 0
        %373 = vmatpush1.bf16.msra.mxu0 0
        %374 = vmatprep.subr.bf16.mxu0 0
        %375 = vmatpush1.bf16.msra.mxu0 0
        %376 = vmatprep.subr.bf16.mxu0 0
        %377 = vmatpush1.bf16.msra.mxu0 0
        %378 = vmatprep.subr.bf16.mxu0 0
        %379 = vmatpush1.bf16.msra.mxu0 0
        %380 = vmatprep.subr.bf16.mxu0 0
        %381 = vmatpush1.bf16.msra.mxu0 0
        %382 = vmatprep.subr.bf16.mxu0 0
        %383 = vmatpush1.bf16.msra.mxu0 0
        %384 = vmatprep.subr.bf16.mxu0 0
        %385 = vmatpush1.bf16.msra.mxu0 0
        %386 = vmatprep.subr.bf16.mxu0 0
        %387 = vmatpush1.bf16.msra.mxu0 0
        %388 = vmatprep.subr.bf16.mxu0 0
        %389 = vmatpush1.bf16.msra.mxu0 0
        %390 = vmatprep.subr.bf16.mxu0 0
        %391 = vmatpush1.bf16.msra.mxu0 0
        %392 = vmatprep.subr.bf16.mxu0 0
        %393 = vmatpush1.bf16.msra.mxu0 0
        %394 = vmatprep.subr.bf16.mxu0 0
        %395 = vmatpush1.bf16.msra.mxu0 0
        %396 = vmatprep.subr.bf16.mxu0 0
        %397 = vmatpush1.bf16.msra.mxu0 0
        %398 = vmatprep.subr.bf16.mxu0 0
        %399 = vmatpush1.bf16.msra.mxu0 0
        %400 = vmatprep.mubr.bf16.mxu0 0
        %401 = vmatmul.mubr.bf16.gmra.mrb[0].mxu0 %v366
        %v402 = vpop.f32.mrb[0].mxu0
        %v403 = vadd.f32 %v347, %v402
        %v404 = vpop.f32.mrb[0].mxu0
        %v405 = vadd.f32 %v351, %v404
        %v406 = vpop.f32.mrb[0].mxu0
        %v407 = vpop.f32.mrb[0].mxu0
        %408 = vdwg.mxu0
        %v409 = vmax.f32 %v403, 0.0
        %v410 = vmax.f32 %v405, 0.0
        %v411 = vpack.c.bf16 %v409, %v409
        %v412 = vpack.c.bf16 %v410, %v410
        %v413 = vld [vmem:[#allocation7] sm:$0xff]
        %v414 = vld [vmem:[#allocation7 + $0x8] sm:$0xff]
        %v415 = vld [vmem:[#allocation7 + $0x10] sm:$0xff]
        %v416 = vld [vmem:[#allocation7 + $0x18] sm:$0xff]
        %v417 = vld [vmem:[#allocation7 + $0x20] sm:$0xff]
        %v418 = vld [vmem:[#allocation7 + $0x28] sm:$0xff]
        %v419 = vld [vmem:[#allocation7 + $0x30] sm:$0xff]
        %v420 = vld [vmem:[#allocation7 + $0x38] sm:$0xff]
        %v421 = vld [vmem:[#allocation7 + $0x40] sm:$0xff]
        %v422 = vld [vmem:[#allocation7 + $0x48] sm:$0xff]
        %v423 = vld [vmem:[#allocation7 + $0x50] sm:$0xff]
        %v424 = vld [vmem:[#allocation7 + $0x58] sm:$0xff]
        %v425 = vld [vmem:[#allocation7 + $0x60] sm:$0xff]
        %v426 = vld [vmem:[#allocation7 + $0x68] sm:$0xff]
        %v427 = vld [vmem:[#allocation7 + $0x70] sm:$0xff]
        %v428 = vld [vmem:[#allocation7 + $0x78] sm:$0xff]
        %v429 = vld [vmem:[#allocation7 + $0x80] sm:$0xff]
        %v430 = vld [vmem:[#allocation7 + $0x88] sm:$0xff]
        %v431 = vld [vmem:[#allocation7 + $0x90] sm:$0xff]
        %v432 = vld [vmem:[#allocation7 + $0x98] sm:$0xff]
        %v433 = vld [vmem:[#allocation7 + $0xa0] sm:$0xff]
        %v434 = vld [vmem:[#allocation7 + $0xa8] sm:$0xff]
        %v435 = vld [vmem:[#allocation7 + $0xb0] sm:$0xff]
        %v436 = vld [vmem:[#allocation7 + $0xb8] sm:$0xff]
        %v437 = vld [vmem:[#allocation7 + $0xc0] sm:$0xff]
        %v438 = vld [vmem:[#allocation7 + $0xc8] sm:$0xff]
        %v439 = vld [vmem:[#allocation7 + $0xd0] sm:$0xff]
        %v440 = vld [vmem:[#allocation7 + $0xd8] sm:$0xff]
        %v441 = vld [vmem:[#allocation7 + $0xe0] sm:$0xff]
        %v442 = vld [vmem:[#allocation7 + $0xe8] sm:$0xff]
        %v443 = vld [vmem:[#allocation7 + $0xf0] sm:$0xff]
        %v444 = vld [vmem:[#allocation7 + $0xf8] sm:$0xff]
        %v445 = vld [vmem:[%s4] sm:$0x3]
        %v447 = vlaneseq
        %v448 = vshrl.u32 %v447, 7
        %v449 = vsub.s32 0, %v448
        %v450 = vrot.slane %v445, %v449
        %v451 = vlaneseq
        %v452 = vshrl.u32 %v451, 7
        %v453 = vsub.s32 1, %v452
        %v454 = vrot.slane %v445, %v453
        %v489 = vunpack.c.l.b16 %v413
        %v490 = vunpack.c.h.b16 %v413
        %v491 = vunpack.c.l.b16 %v414
        %v492 = vunpack.c.h.b16 %v414
        %v493 = vunpack.c.l.b16 %v415
        %v494 = vunpack.c.h.b16 %v415
        %v495 = vunpack.c.l.b16 %v416
        %v496 = vunpack.c.h.b16 %v416
        %v497 = vunpack.c.l.b16 %v417
        %v498 = vunpack.c.h.b16 %v417
        %v499 = vunpack.c.l.b16 %v418
        %v500 = vunpack.c.h.b16 %v418
        %v501 = vunpack.c.l.b16 %v419
        %v502 = vunpack.c.h.b16 %v419
        %v503 = vunpack.c.l.b16 %v420
        %v504 = vunpack.c.h.b16 %v420
        %v505 = vunpack.c.l.b16 %v421
        %v506 = vunpack.c.h.b16 %v421
        %v507 = vunpack.c.l.b16 %v422
        %v508 = vunpack.c.h.b16 %v422
        %v509 = vunpack.c.l.b16 %v423
        %v510 = vunpack.c.h.b16 %v423
        %v511 = vunpack.c.l.b16 %v424
        %v512 = vunpack.c.h.b16 %v424
        %v513 = vunpack.c.l.b16 %v425
        %v514 = vunpack.c.h.b16 %v425
        %v515 = vunpack.c.l.b16 %v426
        %v516 = vunpack.c.h.b16 %v426
        %v517 = vunpack.c.l.b16 %v427
        %v518 = vunpack.c.h.b16 %v427
        %v519 = vunpack.c.l.b16 %v428
        %v520 = vunpack.c.h.b16 %v428
        %v521 = vunpack.c.l.b16 %v429
        %v522 = vunpack.c.h.b16 %v429
        %v523 = vunpack.c.l.b16 %v430
        %v524 = vunpack.c.h.b16 %v430
        %v525 = vunpack.c.l.b16 %v431
        %v526 = vunpack.c.h.b16 %v431
        %v527 = vunpack.c.l.b16 %v432
        %v528 = vunpack.c.h.b16 %v432
        %v529 = vunpack.c.l.b16 %v433
        %v530 = vunpack.c.h.b16 %v433
        %v531 = vunpack.c.l.b16 %v434
        %v532 = vunpack.c.h.b16 %v434
        %v533 = vunpack.c.l.b16 %v435
        %v534 = vunpack.c.h.b16 %v435
        %v535 = vunpack.c.l.b16 %v436
        %v536 = vunpack.c.h.b16 %v436
        %v537 = vunpack.c.l.b16 %v437
        %v538 = vunpack.c.h.b16 %v437
        %v539 = vunpack.c.l.b16 %v438
        %v540 = vunpack.c.h.b16 %v438
        %v541 = vunpack.c.l.b16 %v439
        %v542 = vunpack.c.h.b16 %v439
        %v543 = vunpack.c.l.b16 %v440
        %v544 = vunpack.c.h.b16 %v440
        %v545 = vunpack.c.l.b16 %v441
        %v546 = vunpack.c.h.b16 %v441
        %v547 = vunpack.c.l.b16 %v442
        %v548 = vunpack.c.h.b16 %v442
        %v549 = vunpack.c.l.b16 %v443
        %v550 = vunpack.c.h.b16 %v443
        %v551 = vunpack.c.l.b16 %v444
        %v552 = vunpack.c.h.b16 %v444
        %v553 = vpack.c.b16 %v491, %v489
        %v554 = vpack.c.b16 %v492, %v490
        %v555 = vpack.c.b16 %v495, %v493
        %v556 = vpack.c.b16 %v496, %v494
        %v557 = vpack.c.b16 %v499, %v497
        %v558 = vpack.c.b16 %v500, %v498
        %v559 = vpack.c.b16 %v503, %v501
        %v560 = vpack.c.b16 %v504, %v502
        %v561 = vpack.c.b16 %v507, %v505
        %v562 = vpack.c.b16 %v508, %v506
        %v563 = vpack.c.b16 %v511, %v509
        %v564 = vpack.c.b16 %v512, %v510
        %v565 = vpack.c.b16 %v515, %v513
        %v566 = vpack.c.b16 %v516, %v514
        %v567 = vpack.c.b16 %v519, %v517
        %v568 = vpack.c.b16 %v520, %v518
        %v569 = vpack.c.b16 %v523, %v521
        %v570 = vpack.c.b16 %v524, %v522
        %v571 = vpack.c.b16 %v527, %v525
        %v572 = vpack.c.b16 %v528, %v526
        %v573 = vpack.c.b16 %v531, %v529
        %v574 = vpack.c.b16 %v532, %v530
        %v575 = vpack.c.b16 %v535, %v533
        %v576 = vpack.c.b16 %v536, %v534
        %v577 = vpack.c.b16 %v539, %v537
        %v578 = vpack.c.b16 %v540, %v538
        %v579 = vpack.c.b16 %v543, %v541
        %v580 = vpack.c.b16 %v544, %v542
        %v581 = vpack.c.b16 %v547, %v545
        %v582 = vpack.c.b16 %v548, %v546
        %v583 = vpack.c.b16 %v551, %v549
        %v584 = vpack.c.b16 %v552, %v550
        %617 = vmatprep.subr.bf16.mxu0 %v554
        %618 = vmatpush1.bf16.msra.mxu0 %v553
        %619 = vmatprep.subr.bf16.mxu0 %v556
        %620 = vmatpush1.bf16.msra.mxu0 %v555
        %621 = vmatprep.subr.bf16.mxu0 %v558
        %622 = vmatpush1.bf16.msra.mxu0 %v557
        %623 = vmatprep.subr.bf16.mxu0 %v560
        %624 = vmatpush1.bf16.msra.mxu0 %v559
        %625 = vmatprep.subr.bf16.mxu0 %v562
        %626 = vmatpush1.bf16.msra.mxu0 %v561
        %627 = vmatprep.subr.bf16.mxu0 %v564
        %628 = vmatpush1.bf16.msra.mxu0 %v563
        %629 = vmatprep.subr.bf16.mxu0 %v566
        %630 = vmatpush1.bf16.msra.mxu0 %v565
        %631 = vmatprep.subr.bf16.mxu0 %v568
        %632 = vmatpush1.bf16.msra.mxu0 %v567
        %633 = vmatprep.subr.bf16.mxu0 %v570
        %634 = vmatpush1.bf16.msra.mxu0 %v569
        %635 = vmatprep.subr.bf16.mxu0 %v572
        %636 = vmatpush1.bf16.msra.mxu0 %v571
        %637 = vmatprep.subr.bf16.mxu0 %v574
        %638 = vmatpush1.bf16.msra.mxu0 %v573
        %639 = vmatprep.subr.bf16.mxu0 %v576
        %640 = vmatpush1.bf16.msra.mxu0 %v575
        %641 = vmatprep.subr.bf16.mxu0 %v578
        %642 = vmatpush1.bf16.msra.mxu0 %v577
        %643 = vmatprep.subr.bf16.mxu0 %v580
        %644 = vmatpush1.bf16.msra.mxu0 %v579
        %645 = vmatprep.subr.bf16.mxu0 %v582
        %646 = vmatpush1.bf16.msra.mxu0 %v581
        %647 = vmatprep.subr.bf16.mxu0 %v584
        %648 = vmatpush1.bf16.msra.mxu0 %v583
        %649 = vmatprep.mubr.bf16.mxu0 %v412
        %650 = vmatmul.mubr.bf16.gmra.mrb[0].mxu0 %v411
        %v651 = vpop.f32.mrb[0].mxu0
        %v652 = vadd.f32 %v450, %v651
        %v653 = vpop.f32.mrb[0].mxu0
        %v654 = vadd.f32 %v454, %v653
        %v655 = vpop.f32.mrb[0].mxu0
        %v656 = vpop.f32.mrb[0].mxu0
        %657 = vdwg.mxu0
        %v658 = vmax.f32 %v652, 0.0
        %v659 = vmax.f32 %v654, 0.0
        %v660 = vpack.c.bf16 %v658, %v658
        %v661 = vpack.c.bf16 %v659, %v659
        %v662 = vld [vmem:[#allocation8] sm:$0xf]
        %v663 = vld [vmem:[#allocation8 + $0x4] sm:$0xf]
        %v664 = vld [vmem:[#allocation8 + $0x8] sm:$0xf]
        %v665 = vld [vmem:[#allocation8 + $0xc] sm:$0xf]
        %v666 = vld [vmem:[#allocation8 + $0x10] sm:$0xf]
        %v667 = vld [vmem:[#allocation8 + $0x14] sm:$0xf]
        %v668 = vld [vmem:[#allocation8 + $0x18] sm:$0xf]
        %v669 = vld [vmem:[#allocation8 + $0x1c] sm:$0xf]
        %v670 = vld [vmem:[#allocation8 + $0x20] sm:$0xf]
        %v671 = vld [vmem:[#allocation8 + $0x24] sm:$0xf]
        %v672 = vld [vmem:[#allocation8 + $0x28] sm:$0xf]
        %v673 = vld [vmem:[#allocation8 + $0x2c] sm:$0xf]
        %v674 = vld [vmem:[#allocation8 + $0x30] sm:$0xf]
        %v675 = vld [vmem:[#allocation8 + $0x34] sm:$0xf]
        %v676 = vld [vmem:[#allocation8 + $0x38] sm:$0xf]
        %v677 = vld [vmem:[#allocation8 + $0x3c] sm:$0xf]
        %v678 = vld [vmem:[#allocation8 + $0x40] sm:$0xf]
        %v679 = vld [vmem:[#allocation8 + $0x44] sm:$0xf]
        %v680 = vld [vmem:[#allocation8 + $0x48] sm:$0xf]
        %v681 = vld [vmem:[#allocation8 + $0x4c] sm:$0xf]
        %v682 = vld [vmem:[#allocation8 + $0x50] sm:$0xf]
        %v683 = vld [vmem:[#allocation8 + $0x54] sm:$0xf]
        %v684 = vld [vmem:[#allocation8 + $0x58] sm:$0xf]
        %v685 = vld [vmem:[#allocation8 + $0x5c] sm:$0xf]
        %v686 = vld [vmem:[#allocation8 + $0x60] sm:$0xf]
        %v687 = vld [vmem:[#allocation8 + $0x64] sm:$0xf]
        %v688 = vld [vmem:[#allocation8 + $0x68] sm:$0xf]
        %v689 = vld [vmem:[#allocation8 + $0x6c] sm:$0xf]
        %v690 = vld [vmem:[#allocation8 + $0x70] sm:$0xf]
        %v691 = vld [vmem:[#allocation8 + $0x74] sm:$0xf]
        %v692 = vld [vmem:[#allocation8 + $0x78] sm:$0xf]
        %v693 = vld [vmem:[#allocation8 + $0x7c] sm:$0xf]
        %v694 = vld [vmem:[%s6] sm:$0x1]
        %v696 = vlaneseq
        %v697 = vshrl.u32 %v696, 7
        %v698 = vsub.s32 0, %v697
        %v699 = vrot.slane %v694, %v698
        %v733 = vunpack.c.l.b16 %v662
        %v734 = vunpack.c.l.b16 %v663
        %v735 = vunpack.c.l.b16 %v664
        %v736 = vunpack.c.l.b16 %v665
        %v737 = vunpack.c.l.b16 %v666
        %v738 = vunpack.c.l.b16 %v667
        %v739 = vunpack.c.l.b16 %v668
        %v740 = vunpack.c.l.b16 %v669
        %v741 = vunpack.c.l.b16 %v670
        %v742 = vunpack.c.l.b16 %v671
        %v743 = vunpack.c.l.b16 %v672
        %v744 = vunpack.c.l.b16 %v673
        %v745 = vunpack.c.l.b16 %v674
        %v746 = vunpack.c.l.b16 %v675
        %v747 = vunpack.c.l.b16 %v676
        %v748 = vunpack.c.l.b16 %v677
        %v749 = vunpack.c.l.b16 %v678
        %v750 = vunpack.c.l.b16 %v679
        %v751 = vunpack.c.l.b16 %v680
        %v752 = vunpack.c.l.b16 %v681
        %v753 = vunpack.c.l.b16 %v682
        %v754 = vunpack.c.l.b16 %v683
        %v755 = vunpack.c.l.b16 %v684
        %v756 = vunpack.c.l.b16 %v685
        %v757 = vunpack.c.l.b16 %v686
        %v758 = vunpack.c.l.b16 %v687
        %v759 = vunpack.c.l.b16 %v688
        %v760 = vunpack.c.l.b16 %v689
        %v761 = vunpack.c.l.b16 %v690
        %v762 = vunpack.c.l.b16 %v691
        %v763 = vunpack.c.l.b16 %v692
        %v764 = vunpack.c.l.b16 %v693
        %v765 = vpack.c.b16 %v734, %v733
        %v766 = vpack.c.b16 %v736, %v735
        %v767 = vpack.c.b16 %v738, %v737
        %v768 = vpack.c.b16 %v740, %v739
        %v769 = vpack.c.b16 %v742, %v741
        %v770 = vpack.c.b16 %v744, %v743
        %v771 = vpack.c.b16 %v746, %v745
        %v772 = vpack.c.b16 %v748, %v747
        %v773 = vpack.c.b16 %v750, %v749
        %v774 = vpack.c.b16 %v752, %v751
        %v775 = vpack.c.b16 %v754, %v753
        %v776 = vpack.c.b16 %v756, %v755
        %v777 = vpack.c.b16 %v758, %v757
        %v778 = vpack.c.b16 %v760, %v759
        %v779 = vpack.c.b16 %v762, %v761
        %v780 = vpack.c.b16 %v764, %v763
        %797 = vmatprep.subr.bf16.mxu0 0
        %798 = vmatpush1.bf16.msra.mxu0 %v765
        %799 = vmatprep.subr.bf16.mxu0 0
        %800 = vmatpush1.bf16.msra.mxu0 %v766
        %801 = vmatprep.subr.bf16.mxu0 0
        %802 = vmatpush1.bf16.msra.mxu0 %v767
        %803 = vmatprep.subr.bf16.mxu0 0
        %804 = vmatpush1.bf16.msra.mxu0 %v768
        %805 = vmatprep.subr.bf16.mxu0 0
        %806 = vmatpush1.bf16.msra.mxu0 %v769
        %807 = vmatprep.subr.bf16.mxu0 0
        %808 = vmatpush1.bf16.msra.mxu0 %v770
        %809 = vmatprep.subr.bf16.mxu0 0
        %810 = vmatpush1.bf16.msra.mxu0 %v771
        %811 = vmatprep.subr.bf16.mxu0 0
        %812 = vmatpush1.bf16.msra.mxu0 %v772
        %813 = vmatprep.subr.bf16.mxu0 0
        %814 = vmatpush1.bf16.msra.mxu0 %v773
        %815 = vmatprep.subr.bf16.mxu0 0
        %816 = vmatpush1.bf16.msra.mxu0 %v774
        %817 = vmatprep.subr.bf16.mxu0 0
        %818 = vmatpush1.bf16.msra.mxu0 %v775
        %819 = vmatprep.subr.bf16.mxu0 0
        %820 = vmatpush1.bf16.msra.mxu0 %v776
        %821 = vmatprep.subr.bf16.mxu0 0
        %822 = vmatpush1.bf16.msra.mxu0 %v777
        %823 = vmatprep.subr.bf16.mxu0 0
        %824 = vmatpush1.bf16.msra.mxu0 %v778
        %825 = vmatprep.subr.bf16.mxu0 0
        %826 = vmatpush1.bf16.msra.mxu0 %v779
        %827 = vmatprep.subr.bf16.mxu0 0
        %828 = vmatpush1.bf16.msra.mxu0 %v780
        %829 = vmatprep.mubr.bf16.mxu0 %v661
        %830 = vmatmul.mubr.bf16.gmra.mrb[0].mxu0 %v660
        %v831 = vpop.f32.mrb[0].mxu0
        %v832 = vadd.f32 %v699, %v831
        %v833 = vpop.f32.mrb[0].mxu0
        %v834 = vpop.f32.mrb[0].mxu0
        %v835 = vpop.f32.mrb[0].mxu0
        %836 = vdwg.mxu0
        %v837 = vtanh.pop %v832
        %v838 = vpack.c.bf16 %v837, %v837
        %839 = vst [vmem:[%s337] sm:$0xf] %v838
        %s840 = sand.u32 %s186, 1
        %s841 = scalar_lea.sflag [#allocation4], %s840
        %s842 = sand.u32 %s186, 1
        %s843 = smul.addr %s842, 4
        %s844 = scalar_lea.vmem [#allocation10], %s843
        // Predicated region
        $region65: #{tpu_custom_call.1} parent=47 // pred_check
          %p845 = pneg %p196
        $region66: #{tpu_custom_call.1} parent=47 // pred_check_branch
          %847 = sbr.rel (%p845) target = $region68
        $region67: #{tpu_custom_call.1} parent=47 // pred_region
          %s849 = ssub.s32 64, 64
          %850 = vsyncadd %s841, %s849
          %s851 = smul.addr %s26, 64
          %s852 = scalar_lea.hbm %s7, %s851
          %s854 = sshll.u32 %s844, 4
          %s855 = int_to_ptr.vmem [resolvable:$true] %s854
          %857 = dma.vmem_to_hbm [thread:$0]  %s855, 64, %s852, %s841
        $region68: #{tpu_custom_call.1} parent=47 // pred_fallthru
          _
      $region48: #{tpu_custom_call.1} parent=5 // pred_fallthru
        _
      %p858 = scmp.le.s32.totalorder 2, %s21
      // Predicated region
      $region69: #{tpu_custom_call.1} parent=5 // pred_check
        %p859 = pneg %p858
      $region70: #{tpu_custom_call.1} parent=5 // pred_check_branch
        %861 = sbr.rel (%p859) target = $region72
      $region71: #{tpu_custom_call.1} parent=5 // pred_region
        %s862 = ssub.s32 %s21, 2
        // Predicated region
        $region73: #{tpu_custom_call.1} parent=71 // pred_check
          %p863 = pneg %p202
        $region74: #{tpu_custom_call.1} parent=71 // pred_check_branch
          %865 = sbr.rel (%p863) target = $region76
        $region75: #{tpu_custom_call.1} parent=71 // pred_region
          %s866 = sand.u32 %s187, 1
          %s867 = scalar_lea.sflag [#allocation4], %s866
          %s868 = sand.u32 %s187, 1
          %s869 = smul.addr %s868, 4
          %s870 = scalar_lea.vmem [#allocation10], %s869
          %871 = dma.done %s867, 64
        $region76: #{tpu_custom_call.1} parent=71 // pred_fallthru
          _
      $region72: #{tpu_custom_call.1} parent=5 // pred_fallthru
        _
    $region6: #{tpu_custom_call.1} parent=1 // loop_footer
      %s25 = sadd.s32 1, %s21
    $region7: #{tpu_custom_call.1} parent=1 // loop_footer_branch
      %20 = sbr.rel target = $region3
    $region8: #{tpu_custom_call.1} parent=1 // loop_exit
      _
    %872 = vsyncpa [#allocation3], 1
    %s873 = scalar_lea.sflag [#allocation3], 1
    %874 = vsyncpa %s873, 1
    %875 = vsyncpa [#allocation6], 1
    %876 = vsyncpa [#allocation9], 1
    %877 = vsyncpa [#allocation4], 1
    %s878 = scalar_lea.sflag [#allocation4], 1
    %879 = vsyncpa %s878, 1

</llo_original>
